<compile_context>
chip_gen: v5e
topology: v5e:2x2
jax: 0.10.0
libtpu: 0.0.40
codegen_flags: <defaults>
</compile_context>

<pallas_src>
import jax
import jax.numpy as jnp
from jax import lax
from jax.experimental import pallas as pl
from jax.experimental.pallas import tpu as pltpu


def _cosine_rows_kernel(a_ref, b_ref, o_ref):
    a = a_ref[...].astype(jnp.float32)
    b = b_ref[...].astype(jnp.float32)

    aa = jnp.sum(a * a, axis=-1, keepdims=True)   # (TM, 1)
    bb = jnp.sum(b * b, axis=-1, keepdims=True)   # (TM, 1)
    ab = jnp.sum(a * b, axis=-1, keepdims=True)   # (TM, 1)

    # ab / (sqrt(aa) * sqrt(bb)) == ab * rsqrt(aa * bb)
    # (No eps: the spec module has none, so degenerate all-zero rows give NaN
    #  exactly like the PyTorch reference.)
    o_ref[...] = ab * lax.rsqrt(aa * bb)


def _round_up(x: int, m: int) -> int:
    return ((x + m - 1) // m) * m


def _choose_tm(n: int, d: int, in_itemsize: int) -> int:
    # Double-buffered VMEM footprint per tile row:
    #   2 inputs x 2 buffers x D x itemsize          (input blocks)
    # + 2 buffers x 128 lanes x 4 B                  ((TM,1) f32 output, lane-padded)
    budget = 10 * 1024 * 1024        # fits v5e's 16 MiB scoped-VMEM default
    per_row = 2 * 2 * d * in_itemsize + 2 * 128 * 4
    tm = budget // per_row
    tm = max(8, min(tm, 4096))       # cap: step overhead already well amortized
    tm = (tm // 8) * 8               # sublane alignment
    tm = min(tm, _round_up(n, 8))    # don't tile past the (padded) row count
    return max(8, tm)


def cosine_distance(a: jax.Array, b: jax.Array) -> jax.Array:
    """1 + mean(cosine_similarity(a, b)), reducing over the last dim."""
    assert a.shape == b.shape, "a and b must have the same shape"
    d = a.shape[-1]
    a2 = a.reshape(-1, d)
    b2 = b.reshape(-1, d)
    n = a2.shape[0]

    # TODO(synk): for extremely large feature dims (D > ~60k f32) a single
    # (8, D) tile overflows the VMEM budget; that case needs a D-tiling grid
    # axis carrying per-row partial sums.
    tm = _choose_tm(n, d, a2.dtype.itemsize)
    n_pad = _round_up(n, tm)
    if n_pad != n:
        # Pad with ones: padded rows produce a finite cos (=1) and are sliced
        # off in the wrapper before the mean.
        pad = ((0, n_pad - n), (0, 0))
        a2 = jnp.pad(a2, pad, constant_values=1.0)
        b2 = jnp.pad(b2, pad, constant_values=1.0)

    cos = pl.pallas_call(
        _cosine_rows_kernel,
        out_shape=jax.ShapeDtypeStruct((n_pad, 1), jnp.float32),
        grid=(n_pad // tm,),
        in_specs=[
            pl.BlockSpec((tm, d), lambda i: (i, 0)),
            pl.BlockSpec((tm, d), lambda i: (i, 0)),
        ],
        out_specs=pl.BlockSpec((tm, 1), lambda i: (i, 0)),
        compiler_params=pltpu.CompilerParams(
            dimension_semantics=("parallel",),   # tiles are independent
        ),
    )(a2, b2)

    # Tiny epilogue reduction in plain JAX (negligible vs the streaming kernel).
    return 1.0 + jnp.sum(cos[:n, 0]) / jnp.float32(n)


def _reference(a, b):
    length = jnp.sqrt(jnp.sum(a * a, axis=-1)) * jnp.sqrt(jnp.sum(b * b, axis=-1))
    prod = jnp.sum(a * b, axis=-1)
    return 1.0 + jnp.mean(prod / length)


if __name__ == "__main__":
    key = jax.random.PRNGKey(0)
    k1, k2 = jax.random.split(key)

    # Small shapes consistent with the module: (batch=2, seq=16, hidden=32)
    # -> 32 rows of dimension 32 after flattening leading dims.
    a = jax.random.normal(k1, (2, 16, 32), dtype=jnp.float32)
    b = jax.random.normal(k2, (2, 16, 32), dtype=jnp.float32)

    out = jax.block_until_ready(cosine_distance(a, b))
    ref = jax.block_until_ready(_reference(a, b))
    assert jnp.allclose(out, ref, atol=1e-5, rtol=1e-5), (out, ref)

    print("KERNEL_OK")
</pallas_src>

<mosaic_0001>
module attributes {stable_mosaic.version = 11 : i64} {
  func.func @_cosine_rows_kernel(%arg0: i32, %arg1: memref<32x32xf32, #tpu.memory_space<vmem>>, %arg2: memref<32x32xf32, #tpu.memory_space<vmem>>, %arg3: memref<32x1xf32, #tpu.memory_space<vmem>>) attributes {dimension_semantics = [#tpu.dimension_semantics<parallel>], iteration_bounds = array<i64: 1>, scalar_prefetch = 0 : i64, scratch_operands = 0 : i64, tpu.core_type = #tpu.core_type<tc>, window_params = [{transform_indices = @transform_0, window_bounds = array<i64: 32, 32>}, {transform_indices = @transform_1, window_bounds = array<i64: 32, 32>}, {transform_indices = @transform_2, window_bounds = array<i64: 32, 1>}]} {
    %c0 = arith.constant 0 : index
    %c0_0 = arith.constant 0 : index
    %0 = vector.load %arg1[%c0, %c0_0] : memref<32x32xf32, #tpu.memory_space<vmem>>, vector<32x32xf32>
    %c0_1 = arith.constant 0 : index
    %c0_2 = arith.constant 0 : index
    %1 = vector.load %arg2[%c0_1, %c0_2] : memref<32x32xf32, #tpu.memory_space<vmem>>, vector<32x32xf32>
    %2 = arith.mulf %0, %0 : vector<32x32xf32>
    %cst = arith.constant dense<0.000000e+00> : vector<32xf32>
    %3 = vector.multi_reduction <add>, %2, %cst [1] : vector<32x32xf32> to vector<32xf32>
    %4 = vector.shape_cast %3 : vector<32xf32> to vector<32x1xf32>
    %5 = arith.mulf %1, %1 : vector<32x32xf32>
    %cst_3 = arith.constant dense<0.000000e+00> : vector<32xf32>
    %6 = vector.multi_reduction <add>, %5, %cst_3 [1] : vector<32x32xf32> to vector<32xf32>
    %7 = vector.shape_cast %6 : vector<32xf32> to vector<32x1xf32>
    %8 = arith.mulf %0, %1 : vector<32x32xf32>
    %cst_4 = arith.constant dense<0.000000e+00> : vector<32xf32>
    %9 = vector.multi_reduction <add>, %8, %cst_4 [1] : vector<32x32xf32> to vector<32xf32>
    %10 = vector.shape_cast %9 : vector<32xf32> to vector<32x1xf32>
    %11 = arith.mulf %4, %7 : vector<32x1xf32>
    %12 = math.rsqrt %11 : vector<32x1xf32>
    %13 = arith.mulf %10, %12 : vector<32x1xf32>
    %c0_5 = arith.constant 0 : index
    %c0_6 = arith.constant 0 : index
    %14 = vector.load %arg3[%c0_5, %c0_6] : memref<32x1xf32, #tpu.memory_space<vmem>>, vector<32x1xf32>
    tpu.vector_store %arg3[%c0_5, %c0_6], %13 {strides = array<i32>} : memref<32x1xf32, #tpu.memory_space<vmem>>, vector<32x1xf32>,
    return
  }
  func.func @transform_0(%arg0: i32) -> (i32, i32) {
    %c0_i32 = arith.constant 0 : i32
    %c0_i32_0 = arith.constant 0 : i32
    return %arg0, %c0_i32 : i32, i32
  }
  func.func @transform_1(%arg0: i32) -> (i32, i32) {
    %c0_i32 = arith.constant 0 : i32
    %c0_i32_0 = arith.constant 0 : i32
    return %arg0, %c0_i32 : i32, i32
  }
  func.func @transform_2(%arg0: i32) -> (i32, i32) {
    %c0_i32 = arith.constant 0 : i32
    %c0_i32_0 = arith.constant 0 : i32
    return %arg0, %c0_i32 : i32, i32
  }
}

</mosaic_0001>

<llo_original>
// kernel: tpu_custom_call.1
$region0: #{tpu_custom_call.1}
  #allocation0 [shape = 'u32[]', space=smem, size = 0x4, offset = 0x4, fixed_abs, tag = 'smem constant byte address 0x4 - core index']
  #allocation1 [shape = 'u32[72,128]{1,0:T(1,128)}', space=vmem, size = 0x9000, scoped, tag = 'internal scratch']
  %s0 = inlined_call_operand.hbm [shape: f32[32,32], index: 0, kind: input, shape index: {}]
  %s1 = inlined_call_operand.hbm [shape: f32[32,32], index: 1, kind: input, shape index: {}]
  %s2 = inlined_call_operand.vmem [shape: f32[32,1], index: 2, kind: output, shape index: {}]
  %s3 = sld [smem:[#allocation0]]
  $region26: #{tpu_custom_call.1} parent=0
    _
  %s5 = ssub.s32 1, %s3
  %s6 = scalar_select 0, %s5, %s3
  $region1: #{tpu_custom_call.1} parent=0
    #allocation2 [shape = 'u8[16384]{0}', space=vmem, size = 0x4000, scoped, tag = 'input window, operand 0, single buffered']
    #allocation3 [shape = 's32[1]{0}', space=sflag, size = 0x4, scoped, tag = 'scoped memory for tpu_custom_call.1']
    #allocation4 [shape = 'u8[16384]{0}', space=vmem, size = 0x4000, scoped, tag = 'input window, operand 1, single buffered']
    #allocation5 [shape = 's32[1]{0}', space=sflag, size = 0x4, scoped, tag = 'scoped memory for tpu_custom_call.1']
    %7 = vsyncpa [#allocation3], 0
    %8 = vsyncpa [#allocation5], 0
    // Predicated region
    $region2: #{tpu_custom_call.1} parent=1 // pred_check
      _
    $region3: #{tpu_custom_call.1} parent=1 // pred_check_branch
      %10 = sbr.rel (0) target = $region5
    $region4: #{tpu_custom_call.1} parent=1 // pred_region
      %12 = vsyncadd [#allocation3], 0
      %s13 = sshll.u32 %s0, 4
      %s14 = int_to_ptr.hbm [resolvable:$true] %s13
      %s15 = sshll.u32 [#allocation2], 4
      %s16 = int_to_ptr.vmem [resolvable:$true] %s15
      %21 = dma.hbm_to_vmem [thread:$0]  %s14, 512, %s16, [#allocation3], 128, 128, 8
    $region5: #{tpu_custom_call.1} parent=1 // pred_fallthru
      _
    // Predicated region
    $region6: #{tpu_custom_call.1} parent=1 // pred_check
      _
    $region7: #{tpu_custom_call.1} parent=1 // pred_check_branch
      %23 = sbr.rel (0) target = $region9
    $region8: #{tpu_custom_call.1} parent=1 // pred_region
      %25 = vsyncadd [#allocation5], 0
      %s26 = sshll.u32 %s1, 4
      %s27 = int_to_ptr.hbm [resolvable:$true] %s26
      %s28 = sshll.u32 [#allocation4], 4
      %s29 = int_to_ptr.vmem [resolvable:$true] %s28
      %34 = dma.hbm_to_vmem [thread:$0]  %s27, 512, %s29, [#allocation5], 128, 128, 8
    $region9: #{tpu_custom_call.1} parent=1 // pred_fallthru
      _
    // Predicated region
    $region10: #{tpu_custom_call.1} parent=1 // pred_check
      _
    $region11: #{tpu_custom_call.1} parent=1 // pred_check_branch
      %36 = sbr.rel (0) target = $region13
    $region12: #{tpu_custom_call.1} parent=1 // pred_region
      %38 = dma.done [#allocation3], 512
    $region13: #{tpu_custom_call.1} parent=1 // pred_fallthru
      _
    // Predicated region
    $region14: #{tpu_custom_call.1} parent=1 // pred_check
      _
    $region15: #{tpu_custom_call.1} parent=1 // pred_check_branch
      %40 = sbr.rel (0) target = $region17
    $region16: #{tpu_custom_call.1} parent=1 // pred_region
      %42 = dma.done [#allocation5], 512
    $region17: #{tpu_custom_call.1} parent=1 // pred_fallthru
      _
    %v43 = vld [vmem:[#allocation2] sm:$0xff]
    %v44 = vld [vmem:[#allocation2 + $0x8] sm:$0xff]
    %v45 = vld [vmem:[#allocation2 + $0x10] sm:$0xff]
    %v46 = vld [vmem:[#allocation2 + $0x18] sm:$0xff]
    %v47 = vld [vmem:[#allocation4] sm:$0xff]
    %v48 = vld [vmem:[#allocation4 + $0x8] sm:$0xff]
    %v49 = vld [vmem:[#allocation4 + $0x10] sm:$0xff]
    %v50 = vld [vmem:[#allocation4 + $0x18] sm:$0xff]
    %v51 = vmul.f32 %v43, %v43
    %v52 = vmul.f32 %v44, %v44
    %v53 = vmul.f32 %v45, %v45
    %v54 = vmul.f32 %v46, %v46
    %vm55 = vcmask 261120
    %v56 = vsel %vm55, %v51, 0.0
    %57 = vadd.xlane.f32.xlu0 %v56
    %v58 = vpop.xlane.xlu0 %57
    %v59 = vsel %vm55, %v52, 0.0
    %60 = vadd.xlane.f32.xlu0 %v59
    %v61 = vpop.xlane.xlu0 %60
    %v62 = vsel %vm55, %v53, 0.0
    %63 = vadd.xlane.f32.xlu0 %v62
    %v64 = vpop.xlane.xlu0 %63
    %v65 = vsel %vm55, %v54, 0.0
    %66 = vadd.xlane.f32.xlu0 %v65
    %v67 = vpop.xlane.xlu0 %66
    %v68 = vmul.f32 %v47, %v47
    %v69 = vmul.f32 %v48, %v48
    %v70 = vmul.f32 %v49, %v49
    %v71 = vmul.f32 %v50, %v50
    %v72 = vsel %vm55, %v68, 0.0
    %73 = vadd.xlane.f32.xlu0 %v72
    %v74 = vpop.xlane.xlu0 %73
    %v75 = vsel %vm55, %v69, 0.0
    %76 = vadd.xlane.f32.xlu0 %v75
    %v77 = vpop.xlane.xlu0 %76
    %v78 = vsel %vm55, %v70, 0.0
    %79 = vadd.xlane.f32.xlu0 %v78
    %v80 = vpop.xlane.xlu0 %79
    %v81 = vsel %vm55, %v71, 0.0
    %82 = vadd.xlane.f32.xlu0 %v81
    %v83 = vpop.xlane.xlu0 %82
    %v84 = vmul.f32 %v43, %v47
    %v85 = vmul.f32 %v44, %v48
    %v86 = vmul.f32 %v45, %v49
    %v87 = vmul.f32 %v46, %v50
    %v88 = vsel %vm55, %v84, 0.0
    %89 = vadd.xlane.f32.xlu0 %v88
    %v90 = vpop.xlane.xlu0 %89
    %v91 = vsel %vm55, %v85, 0.0
    %92 = vadd.xlane.f32.xlu0 %v91
    %v93 = vpop.xlane.xlu0 %92
    %v94 = vsel %vm55, %v86, 0.0
    %95 = vadd.xlane.f32.xlu0 %v94
    %v96 = vpop.xlane.xlu0 %95
    %v97 = vsel %vm55, %v87, 0.0
    %98 = vadd.xlane.f32.xlu0 %v97
    %v99 = vpop.xlane.xlu0 %98
    %v100 = vmul.f32 %v58, %v74
    %v101 = vmul.f32 %v61, %v77
    %v102 = vmul.f32 %v64, %v80
    %v103 = vmul.f32 %v67, %v83
    %v104 = vrsqrt.pop %v100
    %v105 = vmul.f32 %v104, %v100
    %v106 = vmul.f32 %v105, %v104
    %v107 = vmul.f32 0.5, %v106
    %v108 = vsub.f32 1.5, %v107
    %v109 = vmul.f32 %v104, %v108
    %vm110 = vweird.f32 %v100
    %vm111 = vweird.f32 %v104
    %vm112 = vmor %vm110, %vm111
    %v113 = vsel %vm112, %v104, %v109
    %v114 = vrsqrt.pop %v101
    %v115 = vmul.f32 %v114, %v101
    %v116 = vmul.f32 %v115, %v114
    %v117 = vmul.f32 0.5, %v116
    %v118 = vsub.f32 1.5, %v117
    %v119 = vmul.f32 %v114, %v118
    %vm120 = vweird.f32 %v101
    %vm121 = vweird.f32 %v114
    %vm122 = vmor %vm120, %vm121
    %v123 = vsel %vm122, %v114, %v119
    %v124 = vrsqrt.pop %v102
    %v125 = vmul.f32 %v124, %v102
    %v126 = vmul.f32 %v125, %v124
    %v127 = vmul.f32 0.5, %v126
    %v128 = vsub.f32 1.5, %v127
    %v129 = vmul.f32 %v124, %v128
    %vm130 = vweird.f32 %v102
    %vm131 = vweird.f32 %v124
    %vm132 = vmor %vm130, %vm131
    %v133 = vsel %vm132, %v124, %v129
    %v134 = vrsqrt.pop %v103
    %v135 = vmul.f32 %v134, %v103
    %v136 = vmul.f32 %v135, %v134
    %v137 = vmul.f32 0.5, %v136
    %v138 = vsub.f32 1.5, %v137
    %v139 = vmul.f32 %v134, %v138
    %vm140 = vweird.f32 %v103
    %vm141 = vweird.f32 %v134
    %vm142 = vmor %vm140, %vm141
    %v143 = vsel %vm142, %v134, %v139
    %v144 = vmul.f32 %v90, %v113
    %v145 = vmul.f32 %v93, %v123
    %v146 = vmul.f32 %v96, %v133
    %v147 = vmul.f32 %v99, %v143
    %vm148 = vcmask 7168
    %149 = vst.msk [vmem:[%s2] sm:$0xff] %vm148, %v144
    %150 = vst.msk [vmem:[%s2 + $0x8] sm:$0xff] %vm148, %v145
    %151 = vst.msk [vmem:[%s2 + $0x10] sm:$0xff] %vm148, %v146
    %152 = vst.msk [vmem:[%s2 + $0x18] sm:$0xff] %vm148, %v147
    // Predicated region
    $region18: #{tpu_custom_call.1} parent=1 // pred_check
      _
    $region19: #{tpu_custom_call.1} parent=1 // pred_check_branch
      %154 = sbr.rel (0) target = $region21
    $region20: #{tpu_custom_call.1} parent=1 // pred_region
      _
    $region21: #{tpu_custom_call.1} parent=1 // pred_fallthru
      _
    // Predicated region
    $region22: #{tpu_custom_call.1} parent=1 // pred_check
      _
    $region23: #{tpu_custom_call.1} parent=1 // pred_check_branch
      %156 = sbr.rel (0) target = $region25
    $region24: #{tpu_custom_call.1} parent=1 // pred_region
      _
    $region25: #{tpu_custom_call.1} parent=1 // pred_fallthru
      _
    %157 = vsyncpa [#allocation3], 1
    %158 = vsyncpa [#allocation5], 1

</llo_original>
